<compile_context>
chip_gen: v5e
topology: v5e:2x2
jax: 0.10.0
libtpu: 0.0.40
codegen_flags: <defaults>
</compile_context>

<pallas_src>
import functools

import jax
import jax.numpy as jnp
from jax.experimental import pallas as pl
from jax.experimental.pallas import tpu as pltpu

IN_F, H1_F, H2_F, OUT_F = 8, 12, 8, 1
ELEMS_PER_ROW = 128 // IN_F          # 16 batch elements per 128-lane row
CHUNK_ROWS = 128                     # inner-loop chunk: 128 rows = 2048 batch elements
MAX_ROWS_PER_BLOCK = 16384           # keeps double-buffered x+out well under 64 MiB VMEM


def _round_up(n: int, m: int) -> int:
    return ((n + m - 1) // m) * m


def _cdiv(a: int, b: int) -> int:
    return (a + b - 1) // b


def mlp_kernel(x_ref, w1_ref, b1_ref, w2_ref, b2_ref, w3_ref, b3_ref, o_ref):
    """One batch tile.

    x_ref: [TR, 128]  (row r, lane 8*j+f  <->  batch 16*r+j, feature f)
    o_ref: [TR, 16]   (row r, lane j      <->  batch 16*r+j)
    w*_ref are block-diagonal kron(I_16, W.T) weights; b*_ref are tiled biases.
    """
    cdt = w1_ref.dtype
    n_chunks = x_ref.shape[0] // CHUNK_ROWS

    @pl.loop(0, n_chunks)
    def _(c):
        r0 = pl.multiple_of(c * CHUNK_ROWS, CHUNK_ROWS)
        x = x_ref[pl.ds(r0, CHUNK_ROWS), :].astype(cdt)            # [C, 128]

        # hidden1: Linear(8, 12) + ReLU, interleaved on lanes -> [C, 192]
        h1 = jnp.dot(x, w1_ref[...], preferred_element_type=jnp.float32) + b1_ref[...]
        h1 = jnp.maximum(h1, 0.0).astype(cdt)

        # hidden2: Linear(12, 8) + ReLU -> [C, 128]
        h2 = jnp.dot(h1, w2_ref[...], preferred_element_type=jnp.float32) + b2_ref[...]
        h2 = jnp.maximum(h2, 0.0).astype(cdt)

        # output: Linear(8, 1) + Sigmoid -> [C, 16]
        z = jnp.dot(h2, w3_ref[...], preferred_element_type=jnp.float32) + b3_ref[...]
        o_ref[pl.ds(r0, CHUNK_ROWS), :] = jax.nn.sigmoid(z).astype(o_ref.dtype)


@functools.partial(jax.jit, static_argnames=("tile_b", "compute_dtype"))
def classifier1_forward(x, params, *, tile_b=131072, compute_dtype=jnp.bfloat16):
    """x: [B, 8] float32 -> [B, 1] float32 (matches PyTorch Classifier1.forward).

    params are in PyTorch layout: weights [out, in], biases [out].
    """
    w1, b1, w2, b2, w3, b3 = params
    batch, in_f = x.shape
    assert in_f == IN_F, x.shape

    # ---- tile geometry (rows of the lane-dense [R, 128] view) --------------
    r_max = max(int(tile_b) // ELEMS_PER_ROW, CHUNK_ROWS)
    r_max = _round_up(min(r_max, MAX_ROWS_PER_BLOCK), CHUNK_ROWS)
    r_need = _cdiv(batch, ELEMS_PER_ROW)
    n_steps = _cdiv(r_need, r_max)
    # Give the second TensorCore (v7x) work when the batch is big enough.
    if n_steps == 1 and r_need >= 16 * CHUNK_ROWS:
        n_steps = 2
    tr = _round_up(_cdiv(r_need, n_steps), CHUNK_ROWS)
    r_pad = tr * n_steps
    b_pad = r_pad * ELEMS_PER_ROW

    # ---- lane-dense view of x (row-major reshape; no transpose pass) -------
    if b_pad != batch:
        x = jnp.pad(x, ((0, b_pad - batch), (0, 0)))
    x2 = x.reshape(r_pad, ELEMS_PER_ROW * IN_F)                     # [R, 128]
    # TODO(synk): callers that can produce x directly as [B/16, 128] (or a batch
    # that is a multiple of 2048) avoid the pad/reshape copy entirely.

    # ---- block-diagonal weights: kron(I_16, W.T); tiled biases --------------
    eye = jnp.eye(ELEMS_PER_ROW, dtype=jnp.float32)
    w1b = jnp.kron(eye, w1.T.astype(jnp.float32)).astype(compute_dtype)   # [128, 192]
    w2b = jnp.kron(eye, w2.T.astype(jnp.float32)).astype(compute_dtype)   # [192, 128]
    w3b = jnp.kron(eye, w3.T.astype(jnp.float32)).astype(compute_dtype)   # [128, 16]
    b1b = jnp.tile(b1.astype(jnp.float32), ELEMS_PER_ROW).reshape(1, -1)  # [1, 192]
    b2b = jnp.tile(b2.astype(jnp.float32), ELEMS_PER_ROW).reshape(1, -1)  # [1, 128]
    b3b = jnp.tile(b3.astype(jnp.float32), ELEMS_PER_ROW).reshape(1, -1)  # [1, 16]

    def const(shape):  # resident operand: same block every grid step
        return pl.BlockSpec(shape, lambda i: (0, 0))

    # VMEM: double-buffered x block (TR x 128 f32) + out block (TR x 16 f32,
    # lane-padded to 128 in VMEM) + resident weights + headroom.
    vmem_bytes = min(4 * tr * 512 + (8 << 20), 48 << 20)

    cost = pl.CostEstimate(
        flops=2 * r_pad * (128 * 192 + 192 * 128 + 128 * 16),
        transcendentals=b_pad,
        bytes_accessed=b_pad * (IN_F * 4 + OUT_F * 4)
        + (128 * 192 + 192 * 128 + 128 * 16) * jnp.dtype(compute_dtype).itemsize,
    )

    out = pl.pallas_call(
        mlp_kernel,
        out_shape=jax.ShapeDtypeStruct((r_pad, ELEMS_PER_ROW), jnp.float32),
        grid_spec=pl.GridSpec(
            grid=(n_steps,),
            in_specs=[
                pl.BlockSpec((tr, 128), lambda i: (i, 0)),   # x tile (pipelined)
                const((128, ELEMS_PER_ROW * H1_F)),          # kron(I16, w1.T)
                const((1, ELEMS_PER_ROW * H1_F)),            # tiled b1
                const((ELEMS_PER_ROW * H1_F, 128)),          # kron(I16, w2.T)
                const((1, 128)),                             # tiled b2
                const((128, ELEMS_PER_ROW)),                 # kron(I16, w3.T)
                const((1, ELEMS_PER_ROW)),                   # tiled b3
            ],
            out_specs=pl.BlockSpec((tr, ELEMS_PER_ROW), lambda i: (i, 0)),
        ),
        compiler_params=pltpu.CompilerParams(
            dimension_semantics=("parallel",),   # independent batch tiles; v7x dual-TC
            vmem_limit_bytes=vmem_bytes,
        ),
        cost_estimate=cost,
    )(x2, w1b, b1b, w2b, b2b, w3b, b3b)

    out = out.reshape(b_pad, 1)                  # row-major: (r, j) -> batch 16*r+j
    if b_pad != batch:
        out = out[:batch]
    return out                                   # [B, 1] f32


def init_params(key):
    """Deterministic init mimicking nn.Linear defaults, in PyTorch layout
    (weights [out, in], biases [out])."""
    def linear_init(k, fan_in, fan_out):
        kw, kb = jax.random.split(k)
        bound = 1.0 / jnp.sqrt(jnp.float32(fan_in))
        w = jax.random.uniform(kw, (fan_out, fan_in), jnp.float32, -bound, bound)
        b = jax.random.uniform(kb, (fan_out,), jnp.float32, -bound, bound)
        return w, b

    k1, k2, k3 = jax.random.split(key, 3)
    w1, b1 = linear_init(k1, IN_F, H1_F)
    w2, b2 = linear_init(k2, H1_F, H2_F)
    w3, b3 = linear_init(k3, H2_F, OUT_F)
    return (w1, b1, w2, b2, w3, b3)


def reference_forward(x, params):
    """Pure-JAX f32 reference (exact PyTorch module semantics)."""
    w1, b1, w2, b2, w3, b3 = params
    h1 = jnp.maximum(x @ w1.T + b1, 0.0)
    h2 = jnp.maximum(h1 @ w2.T + b2, 0.0)
    return jax.nn.sigmoid(h2 @ w3.T + b3)


def reference_forward_bf16(x, params, compute_dtype=jnp.bfloat16):
    """Reference mirroring the kernel's bf16-operand / f32-accumulate math."""
    w1, b1, w2, b2, w3, b3 = params
    xc = x.astype(compute_dtype)
    h1 = jnp.dot(xc, w1.astype(compute_dtype).T, preferred_element_type=jnp.float32) + b1
    h1 = jnp.maximum(h1, 0.0).astype(compute_dtype)
    h2 = jnp.dot(h1, w2.astype(compute_dtype).T, preferred_element_type=jnp.float32) + b2
    h2 = jnp.maximum(h2, 0.0).astype(compute_dtype)
    z = jnp.dot(h2, w3.astype(compute_dtype).T, preferred_element_type=jnp.float32) + b3
    return jax.nn.sigmoid(z)


if __name__ == "__main__":
    key = jax.random.PRNGKey(0)
    k_params, k_x1, k_x2 = jax.random.split(key, 3)
    params = init_params(k_params)

    # Case 1: small batch -> single grid step, single inner chunk.
    x1 = jax.random.normal(k_x1, (64, 8), jnp.float32)
    out1 = jax.block_until_ready(classifier1_forward(x1, params))
    assert out1.shape == (64, 1), out1.shape
    assert jnp.allclose(out1, reference_forward_bf16(x1, params), atol=5e-3, rtol=5e-3)
    assert jnp.allclose(out1, reference_forward(x1, params), atol=2e-2, rtol=2e-2)

    # Case 2: non-multiple batch, default tile -> single grid step, multiple
    # inner pl.loop chunks (exercises the in-kernel chunk loop + padding).
    x2 = jax.random.normal(k_x2, (5000, 8), jnp.float32)
    out2 = jax.block_until_ready(classifier1_forward(x2, params))
    assert out2.shape == (5000, 1), out2.shape
    assert jnp.allclose(out2, reference_forward_bf16(x2, params), atol=5e-3, rtol=5e-3)
    assert jnp.allclose(out2, reference_forward(x2, params), atol=2e-2, rtol=2e-2)

    # Case 3: same batch with a small explicit tile -> multi-step pipelined grid
    # (exercises batch tiling across grid steps + remainder handling).
    out3 = jax.block_until_ready(classifier1_forward(x2, params, tile_b=2048))
    assert out3.shape == (5000, 1), out3.shape
    assert jnp.allclose(out3, reference_forward_bf16(x2, params), atol=5e-3, rtol=5e-3)
    assert jnp.allclose(out3, reference_forward(x2, params), atol=2e-2, rtol=2e-2)

    print("KERNEL_OK")
</pallas_src>

<mosaic_0001>
module attributes {stable_mosaic.version = 11 : i64} {
  func.func @mlp_kernel(%arg0: i32, %arg1: memref<128x128xf32, #tpu.memory_space<vmem>>, %arg2: memref<128x192xbf16, #tpu.memory_space<vmem>>, %arg3: memref<1x192xf32, #tpu.memory_space<vmem>>, %arg4: memref<192x128xbf16, #tpu.memory_space<vmem>>, %arg5: memref<1x128xf32, #tpu.memory_space<vmem>>, %arg6: memref<128x16xbf16, #tpu.memory_space<vmem>>, %arg7: memref<1x16xf32, #tpu.memory_space<vmem>>, %arg8: memref<128x16xf32, #tpu.memory_space<vmem>>) attributes {dimension_semantics = [#tpu.dimension_semantics<parallel>], iteration_bounds = array<i64: 1>, scalar_prefetch = 0 : i64, scratch_operands = 0 : i64, tpu.core_type = #tpu.core_type<tc>, window_params = [{transform_indices = @transform_0, window_bounds = array<i64: 128, 128>}, {pipeline_mode = #tpu.pipeline_mode<synchronous>, transform_indices = @transform_1, window_bounds = array<i64: 128, 192>}, {pipeline_mode = #tpu.pipeline_mode<synchronous>, transform_indices = @transform_2, window_bounds = array<i64: 1, 192>}, {pipeline_mode = #tpu.pipeline_mode<synchronous>, transform_indices = @transform_3, window_bounds = array<i64: 192, 128>}, {pipeline_mode = #tpu.pipeline_mode<synchronous>, transform_indices = @transform_4, window_bounds = array<i64: 1, 128>}, {pipeline_mode = #tpu.pipeline_mode<synchronous>, transform_indices = @transform_5, window_bounds = array<i64: 128, 16>}, {pipeline_mode = #tpu.pipeline_mode<synchronous>, transform_indices = @transform_6, window_bounds = array<i64: 1, 16>}, {transform_indices = @transform_7, window_bounds = array<i64: 128, 16>}]} {
    %c0_i32 = arith.constant 0 : i32
    %c1_i32 = arith.constant 1 : i32
    %0 = arith.muli %c0_i32, %c1_i32 : i32
    %c0_i32_0 = arith.constant 0 : i32
    %1 = arith.addi %c0_i32_0, %0 : i32
    %c128_i32 = arith.constant 128 : i32
    %2 = arith.muli %1, %c128_i32 : i32
    %3 = tpu.assume_multiple %2, 128 : i32
    %4 = arith.index_cast %3 : i32 to index
    %c0 = arith.constant 0 : index
    %5 = vector.load %arg1[%4, %c0] : memref<128x128xf32, #tpu.memory_space<vmem>>, vector<128x128xf32>
    %6 = arith.truncf %5 : vector<128x128xf32> to vector<128x128xbf16>
    %c0_1 = arith.constant 0 : index
    %c0_2 = arith.constant 0 : index
    %7 = vector.load %arg2[%c0_1, %c0_2] : memref<128x192xbf16, #tpu.memory_space<vmem>>, vector<128x192xbf16>
    %cst = arith.constant dense<0.000000e+00> : vector<128x192xf32>
    %8 = tpu.matmul %6, %7, %cst {dimension_numbers = #tpu.dot_dimension_numbers<[1], [0], [0], [1], [0, 0, 1, 1], [], []>} : vector<128x128xbf16>, vector<128x192xbf16>, vector<128x192xf32> -> vector<128x192xf32>
    %c0_3 = arith.constant 0 : index
    %c0_4 = arith.constant 0 : index
    %9 = vector.load %arg3[%c0_3, %c0_4] : memref<1x192xf32, #tpu.memory_space<vmem>>, vector<1x192xf32>
    %10 = vector.broadcast %9 : vector<1x192xf32> to vector<128x192xf32>
    %11 = arith.addf %8, %10 : vector<128x192xf32>
    %cst_5 = arith.constant 0.000000e+00 : f32
    %12 = vector.broadcast %cst_5 : f32 to vector<128x192xf32>
    %13 = arith.maximumf %11, %12 : vector<128x192xf32>
    %14 = arith.truncf %13 : vector<128x192xf32> to vector<128x192xbf16>
    %c0_6 = arith.constant 0 : index
    %c0_7 = arith.constant 0 : index
    %15 = vector.load %arg4[%c0_6, %c0_7] : memref<192x128xbf16, #tpu.memory_space<vmem>>, vector<192x128xbf16>
    %cst_8 = arith.constant dense<0.000000e+00> : vector<128x128xf32>
    %16 = tpu.matmul %14, %15, %cst_8 {dimension_numbers = #tpu.dot_dimension_numbers<[1], [0], [0], [1], [0, 0, 1, 1], [], []>} : vector<128x192xbf16>, vector<192x128xbf16>, vector<128x128xf32> -> vector<128x128xf32>
    %c0_9 = arith.constant 0 : index
    %c0_10 = arith.constant 0 : index
    %17 = vector.load %arg5[%c0_9, %c0_10] : memref<1x128xf32, #tpu.memory_space<vmem>>, vector<1x128xf32>
    %18 = vector.broadcast %17 : vector<1x128xf32> to vector<128x128xf32>
    %19 = arith.addf %16, %18 : vector<128x128xf32>
    %cst_11 = arith.constant 0.000000e+00 : f32
    %20 = vector.broadcast %cst_11 : f32 to vector<128x128xf32>
    %21 = arith.maximumf %19, %20 : vector<128x128xf32>
    %22 = arith.truncf %21 : vector<128x128xf32> to vector<128x128xbf16>
    %c0_12 = arith.constant 0 : index
    %c0_13 = arith.constant 0 : index
    %23 = vector.load %arg6[%c0_12, %c0_13] : memref<128x16xbf16, #tpu.memory_space<vmem>>, vector<128x16xbf16>
    %cst_14 = arith.constant dense<0.000000e+00> : vector<128x16xf32>
    %24 = tpu.matmul %22, %23, %cst_14 {dimension_numbers = #tpu.dot_dimension_numbers<[1], [0], [0], [1], [0, 0, 1, 1], [], []>} : vector<128x128xbf16>, vector<128x16xbf16>, vector<128x16xf32> -> vector<128x16xf32>
    %c0_15 = arith.constant 0 : index
    %c0_16 = arith.constant 0 : index
    %25 = vector.load %arg7[%c0_15, %c0_16] : memref<1x16xf32, #tpu.memory_space<vmem>>, vector<1x16xf32>
    %26 = vector.broadcast %25 : vector<1x16xf32> to vector<128x16xf32>
    %27 = arith.addf %24, %26 : vector<128x16xf32>
    %28 = arith.negf %27 : vector<128x16xf32>
    %29 = math.exp %28 : vector<128x16xf32>
    %cst_17 = arith.constant 1.000000e+00 : f32
    %30 = vector.broadcast %cst_17 : f32 to vector<128x16xf32>
    %31 = arith.addf %30, %29 : vector<128x16xf32>
    %32 = arith.divf %30, %31 : vector<128x16xf32>
    %33 = arith.index_cast %3 : i32 to index
    %c0_18 = arith.constant 0 : index
    %34 = vector.load %arg8[%33, %c0_18] : memref<128x16xf32, #tpu.memory_space<vmem>>, vector<128x16xf32>
    tpu.vector_store %arg8[%33, %c0_18], %32 {strides = array<i32>} : memref<128x16xf32, #tpu.memory_space<vmem>>, vector<128x16xf32>,
    %c1_i32_19 = arith.constant 1 : i32
    return
  }
  func.func @transform_0(%arg0: i32) -> (i32, i32) {
    %c0_i32 = arith.constant 0 : i32
    %c0_i32_0 = arith.constant 0 : i32
    return %arg0, %c0_i32 : i32, i32
  }
  func.func @transform_1(%arg0: i32) -> (i32, i32) {
    %c0_i32 = arith.constant 0 : i32
    %c0_i32_0 = arith.constant 0 : i32
    %c0_i32_1 = arith.constant 0 : i32
    return %c0_i32, %c0_i32_0 : i32, i32
  }
  func.func @transform_2(%arg0: i32) -> (i32, i32) {
    %c0_i32 = arith.constant 0 : i32
    %c0_i32_0 = arith.constant 0 : i32
    %c0_i32_1 = arith.constant 0 : i32
    return %c0_i32, %c0_i32_0 : i32, i32
  }
  func.func @transform_3(%arg0: i32) -> (i32, i32) {
    %c0_i32 = arith.constant 0 : i32
    %c0_i32_0 = arith.constant 0 : i32
    %c0_i32_1 = arith.constant 0 : i32
    return %c0_i32, %c0_i32_0 : i32, i32
  }
  func.func @transform_4(%arg0: i32) -> (i32, i32) {
    %c0_i32 = arith.constant 0 : i32
    %c0_i32_0 = arith.constant 0 : i32
    %c0_i32_1 = arith.constant 0 : i32
    return %c0_i32, %c0_i32_0 : i32, i32
  }
  func.func @transform_5(%arg0: i32) -> (i32, i32) {
    %c0_i32 = arith.constant 0 : i32
    %c0_i32_0 = arith.constant 0 : i32
    %c0_i32_1 = arith.constant 0 : i32
    return %c0_i32, %c0_i32_0 : i32, i32
  }
  func.func @transform_6(%arg0: i32) -> (i32, i32) {
    %c0_i32 = arith.constant 0 : i32
    %c0_i32_0 = arith.constant 0 : i32
    %c0_i32_1 = arith.constant 0 : i32
    return %c0_i32, %c0_i32_0 : i32, i32
  }
  func.func @transform_7(%arg0: i32) -> (i32, i32) {
    %c0_i32 = arith.constant 0 : i32
    %c0_i32_0 = arith.constant 0 : i32
    return %arg0, %c0_i32 : i32, i32
  }
}

</mosaic_0001>

<llo_original>
// kernel: tile.18
$region0: #{tile.18}
  #allocation0 [shape = 's32[1]{0}', space=sflag, size = 0x4, scoped, tag = 'scoped memory for tile.18']
  %s0 = inlined_call_operand.vmem [shape: f32[12], index: 0, kind: input, shape index: {}]
  %s1 = inlined_call_operand.vmem [shape: f32[16,12], index: 1, kind: output, shape index: {}]
  // Predicated region
  $region2: #{tile.18} parent=0 // pred_check
    _
  $region3: #{tile.18} parent=0 // pred_check_branch
    %3 = sbr.rel (0) target = $region5
  $region4: #{tile.18} parent=0 // pred_region
    _
  $region5: #{tile.18} parent=0 // pred_fallthru
    _
  %v4 = vld [vmem:[%s0] ss:$0 sm:$0xff]
  %5 = vst [vmem:[%s1] sm:$0xff] %v4
  %s6 = scalar_lea.vmem %s1, 8
  %7 = vst [vmem:[%s6] sm:$0xff] %v4

// kernel: tile.19
$region0: #{tile.19}
  %s0 = inlined_call_operand.vmem [shape: f32[16,12], index: 0, kind: input, shape index: {}]
  %s1 = inlined_call_operand.vmem [shape: f32[1,192], index: 1, kind: output, shape index: {}]
  $region1: #{tile.19} parent=0
    #allocation0 [shape = 'u8[8192]{0}', space=vmem, size = 0x2000, scoped, tag = 'scoped mem for output reshape']
    %v2 = vld [vmem:[%s0] sm:$0x1]
    %vm3 = vcmask 97280
    %4 = vst.msk [vmem:[#allocation0] sm:$0x1] %vm3, %v2
    %s5 = scalar_lea.vmem %s0, 10
    %v6 = vld [vmem:[%s5] sm:$0x1]
    %s7 = scalar_lea.vmem %s0, 10
    %v8 = vld [vmem:[%s7] sm:$0x1]
    %vm9 = vcmask 64512
    %v10 = vsel %vm9, %v8, %v6
    %11 = vrot.lane.b32.xlu0 %v10, 120
    %v12 = vpop.permute.xlu0 %11
    %vm13 = vcmask 31744
    %s14 = scalar_lea.vmem [#allocation0], 8
    %15 = vst.msk [vmem:[%s14] sm:$0x1] %vm13, %v12
    %vm16 = vcmask 1048512
    %17 = vst.msk [vmem:[#allocation0] sm:$0x1] %vm16, %v12
    %s18 = scalar_lea.vmem %s0, 9
    %v19 = vld [vmem:[%s18] sm:$0x1]
    %20 = vrot.lane.b32.xlu0 %v19, 108
    %v21 = vpop.permute.xlu0 %20
    %vm22 = vcmask 982880
    %23 = vst.msk [vmem:[#allocation0] sm:$0x1] %vm22, %v21
    %s24 = scalar_lea.vmem %s0, 8
    %v25 = vld [vmem:[%s24] sm:$0x1]
    %26 = vrot.lane.b32.xlu0 %v25, 96
    %v27 = vpop.permute.xlu0 %26
    %vm28 = vcmask 884480
    %29 = vst.msk [vmem:[#allocation0] sm:$0x1] %vm28, %v27
    %s30 = scalar_lea.vmem %s0, 7
    %v31 = vld [vmem:[%s30] sm:$0x1]
    %32 = vrot.lane.b32.xlu0 %v31, 84
    %v33 = vpop.permute.xlu0 %32
    %vm34 = vcmask 786080
    %35 = vst.msk [vmem:[#allocation0] sm:$0x1] %vm34, %v33
    %s36 = scalar_lea.vmem %s0, 6
    %v37 = vld [vmem:[%s36] sm:$0x1]
    %38 = vrot.lane.b32.xlu0 %v37, 72
    %v39 = vpop.permute.xlu0 %38
    %vm40 = vcmask 687680
    %41 = vst.msk [vmem:[#allocation0] sm:$0x1] %vm40, %v39
    %s42 = scalar_lea.vmem %s0, 5
    %v43 = vld [vmem:[%s42] sm:$0x1]
    %44 = vrot.lane.b32.xlu0 %v43, 60
    %v45 = vpop.permute.xlu0 %44
    %vm46 = vcmask 589280
    %47 = vst.msk [vmem:[#allocation0] sm:$0x1] %vm46, %v45
    %s48 = scalar_lea.vmem %s0, 15
    %v49 = vld [vmem:[%s48] sm:$0x1]
    %50 = vrot.lane.b32.xlu0 %v49, 52
    %v51 = vpop.permute.xlu0 %50
    %vm52 = vcmask 523680
    %s53 = scalar_lea.vmem [#allocation0], 8
    %54 = vst.msk [vmem:[%s53] sm:$0x1] %vm52, %v51
    %s55 = scalar_lea.vmem %s0, 4
    %v56 = vld [vmem:[%s55] sm:$0x1]
    %57 = vrot.lane.b32.xlu0 %v56, 48
    %v58 = vpop.permute.xlu0 %57
    %vm59 = vcmask 490880
    %60 = vst.msk [vmem:[#allocation0] sm:$0x1] %vm59, %v58
    %s61 = scalar_lea.vmem %s0, 14
    %v62 = vld [vmem:[%s61] sm:$0x1]
    %63 = vrot.lane.b32.xlu0 %v62, 40
    %v64 = vpop.permute.xlu0 %63
    %vm65 = vcmask 425280
    %s66 = scalar_lea.vmem [#allocation0], 8
    %67 = vst.msk [vmem:[%s66] sm:$0x1] %vm65, %v64
    %s68 = scalar_lea.vmem %s0, 3
    %v69 = vld [vmem:[%s68] sm:$0x1]
    %70 = vrot.lane.b32.xlu0 %v69, 36
    %v71 = vpop.permute.xlu0 %70
    %vm72 = vcmask 392480
    %73 = vst.msk [vmem:[#allocation0] sm:$0x1] %vm72, %v71
    %s74 = scalar_lea.vmem %s0, 13
    %v75 = vld [vmem:[%s74] sm:$0x1]
    %76 = vrot.lane.b32.xlu0 %v75, 28
    %v77 = vpop.permute.xlu0 %76
    %vm78 = vcmask 326880
    %s79 = scalar_lea.vmem [#allocation0], 8
    %80 = vst.msk [vmem:[%s79] sm:$0x1] %vm78, %v77
    %s81 = scalar_lea.vmem %s0, 2
    %v82 = vld [vmem:[%s81] sm:$0x1]
    %83 = vrot.lane.b32.xlu0 %v82, 24
    %v84 = vpop.permute.xlu0 %83
    %vm85 = vcmask 294080
    %86 = vst.msk [vmem:[#allocation0] sm:$0x1] %vm85, %v84
    %s87 = scalar_lea.vmem %s0, 12
    %v88 = vld [vmem:[%s87] sm:$0x1]
    %89 = vrot.lane.b32.xlu0 %v88, 16
    %v90 = vpop.permute.xlu0 %89
    %vm91 = vcmask 228480
    %s92 = scalar_lea.vmem [#allocation0], 8
    %93 = vst.msk [vmem:[%s92] sm:$0x1] %vm91, %v90
    %s94 = scalar_lea.vmem %s0, 1
    %v95 = vld [vmem:[%s94] sm:$0x1]
    %96 = vrot.lane.b32.xlu0 %v95, 12
    %v97 = vpop.permute.xlu0 %96
    %vm98 = vcmask 195680
    %99 = vst.msk [vmem:[#allocation0] sm:$0x1] %vm98, %v97
    %s100 = scalar_lea.vmem %s0, 11
    %v101 = vld [vmem:[%s100] sm:$0x1]
    %102 = vrot.lane.b32.xlu0 %v101, 4
    %v103 = vpop.permute.xlu0 %102
    %vm104 = vcmask 130080
    %s105 = scalar_lea.vmem [#allocation0], 8
    %106 = vst.msk [vmem:[%s105] sm:$0x1] %vm104, %v103
    %s108 = ssub.s32 2, 1
    %v109 = vld [vmem:[#allocation0] sm:%s108]
    %s111 = ssub.s32 2, 1
    %112 = vst [vmem:[%s1] sm:%s111] %v109
    %s113 = scalar_lea.vmem [#allocation0], 8
    %v114 = vld [vmem:[%s113] sm:%s108]
    %s116 = ssub.s32 2, 1
    %s117 = scalar_lea.vmem %s1, 1
    %118 = vst [vmem:[%s117] sm:%s116] %v114

// kernel: tile.23
$region0: #{tile.23}
  #allocation0 [shape = 's32[1]{0}', space=sflag, size = 0x4, scoped, tag = 'scoped memory for tile.23']
  %s0 = inlined_call_operand.vmem [shape: f32[8], index: 0, kind: input, shape index: {}]
  %s1 = inlined_call_operand.vmem [shape: f32[16,8], index: 1, kind: output, shape index: {}]
  // Predicated region
  $region2: #{tile.23} parent=0 // pred_check
    _
  $region3: #{tile.23} parent=0 // pred_check_branch
    %3 = sbr.rel (0) target = $region5
  $region4: #{tile.23} parent=0 // pred_region
    _
  $region5: #{tile.23} parent=0 // pred_fallthru
    _
  %v4 = vld [vmem:[%s0] ss:$0 sm:$0xff]
  %5 = vst [vmem:[%s1] sm:$0xff] %v4
  %s6 = scalar_lea.vmem %s1, 8
  %7 = vst [vmem:[%s6] sm:$0xff] %v4

// kernel: tile.24
$region0: #{tile.24}
  %s0 = inlined_call_operand.vmem [shape: f32[16,8], index: 0, kind: input, shape index: {}]
  %s1 = inlined_call_operand.vmem [shape: f32[1,128], index: 1, kind: output, shape index: {}]
  $region1: #{tile.24} parent=0
    #allocation0 [shape = 'u8[4096]{0}', space=vmem, size = 0x1000, scoped, tag = 'scoped mem for output reshape']
    %v2 = vld [vmem:[%s0] sm:$0x1]
    %vm3 = vcmask 64512
    %4 = vst.msk [vmem:[#allocation0] sm:$0x1] %vm3, %v2
    %s5 = scalar_lea.vmem %s0, 15
    %v6 = vld [vmem:[%s5] sm:$0x1]
    %7 = vrot.lane.b32.xlu0 %v6, 120
    %v8 = vpop.permute.xlu0 %7
    %vm9 = vcmask 1048512
    %10 = vst.msk [vmem:[#allocation0] sm:$0x1] %vm9, %v8
    %s11 = scalar_lea.vmem %s0, 14
    %v12 = vld [vmem:[%s11] sm:$0x1]
    %13 = vrot.lane.b32.xlu0 %v12, 112
    %v14 = vpop.permute.xlu0 %13
    %vm15 = vcmask 982912
    %16 = vst.msk [vmem:[#allocation0] sm:$0x1] %vm15, %v14
    %s17 = scalar_lea.vmem %s0, 13
    %v18 = vld [vmem:[%s17] sm:$0x1]
    %19 = vrot.lane.b32.xlu0 %v18, 104
    %v20 = vpop.permute.xlu0 %19
    %vm21 = vcmask 917312
    %22 = vst.msk [vmem:[#allocation0] sm:$0x1] %vm21, %v20
    %s23 = scalar_lea.vmem %s0, 12
    %v24 = vld [vmem:[%s23] sm:$0x1]
    %25 = vrot.lane.b32.xlu0 %v24, 96
    %v26 = vpop.permute.xlu0 %25
    %vm27 = vcmask 851712
    %28 = vst.msk [vmem:[#allocation0] sm:$0x1] %vm27, %v26
    %s29 = scalar_lea.vmem %s0, 11
    %v30 = vld [vmem:[%s29] sm:$0x1]
    %31 = vrot.lane.b32.xlu0 %v30, 88
    %v32 = vpop.permute.xlu0 %31
    %vm33 = vcmask 786112
    %34 = vst.msk [vmem:[#allocation0] sm:$0x1] %vm33, %v32
    %s35 = scalar_lea.vmem %s0, 10
    %v36 = vld [vmem:[%s35] sm:$0x1]
    %37 = vrot.lane.b32.xlu0 %v36, 80
    %v38 = vpop.permute.xlu0 %37
    %vm39 = vcmask 720512
    %40 = vst.msk [vmem:[#allocation0] sm:$0x1] %vm39, %v38
    %s41 = scalar_lea.vmem %s0, 9
    %v42 = vld [vmem:[%s41] sm:$0x1]
    %43 = vrot.lane.b32.xlu0 %v42, 72
    %v44 = vpop.permute.xlu0 %43
    %vm45 = vcmask 654912
    %46 = vst.msk [vmem:[#allocation0] sm:$0x1] %vm45, %v44
    %s47 = scalar_lea.vmem %s0, 8
    %v48 = vld [vmem:[%s47] sm:$0x1]
    %49 = vrot.lane.b32.xlu0 %v48, 64
    %v50 = vpop.permute.xlu0 %49
    %vm51 = vcmask 589312
    %52 = vst.msk [vmem:[#allocation0] sm:$0x1] %vm51, %v50
    %s53 = scalar_lea.vmem %s0, 7
    %v54 = vld [vmem:[%s53] sm:$0x1]
    %55 = vrot.lane.b32.xlu0 %v54, 56
    %v56 = vpop.permute.xlu0 %55
    %vm57 = vcmask 523712
    %58 = vst.msk [vmem:[#allocation0] sm:$0x1] %vm57, %v56
    %s59 = scalar_lea.vmem %s0, 6
    %v60 = vld [vmem:[%s59] sm:$0x1]
    %61 = vrot.lane.b32.xlu0 %v60, 48
    %v62 = vpop.permute.xlu0 %61
    %vm63 = vcmask 458112
    %64 = vst.msk [vmem:[#allocation0] sm:$0x1] %vm63, %v62
    %s65 = scalar_lea.vmem %s0, 5
    %v66 = vld [vmem:[%s65] sm:$0x1]
    %67 = vrot.lane.b32.xlu0 %v66, 40
    %v68 = vpop.permute.xlu0 %67
    %vm69 = vcmask 392512
    %70 = vst.msk [vmem:[#allocation0] sm:$0x1] %vm69, %v68
    %s71 = scalar_lea.vmem %s0, 4
    %v72 = vld [vmem:[%s71] sm:$0x1]
    %73 = vrot.lane.b32.xlu0 %v72, 32
    %v74 = vpop.permute.xlu0 %73
    %vm75 = vcmask 326912
    %76 = vst.msk [vmem:[#allocation0] sm:$0x1] %vm75, %v74
    %s77 = scalar_lea.vmem %s0, 3
    %v78 = vld [vmem:[%s77] sm:$0x1]
    %79 = vrot.lane.b32.xlu0 %v78, 24
    %v80 = vpop.permute.xlu0 %79
    %vm81 = vcmask 261312
    %82 = vst.msk [vmem:[#allocation0] sm:$0x1] %vm81, %v80
    %s83 = scalar_lea.vmem %s0, 2
    %v84 = vld [vmem:[%s83] sm:$0x1]
    %85 = vrot.lane.b32.xlu0 %v84, 16
    %v86 = vpop.permute.xlu0 %85
    %vm87 = vcmask 195712
    %88 = vst.msk [vmem:[#allocation0] sm:$0x1] %vm87, %v86
    %s89 = scalar_lea.vmem %s0, 1
    %v90 = vld [vmem:[%s89] sm:$0x1]
    %91 = vrot.lane.b32.xlu0 %v90, 8
    %v92 = vpop.permute.xlu0 %91
    %vm93 = vcmask 130112
    %94 = vst.msk [vmem:[#allocation0] sm:$0x1] %vm93, %v92
    %s96 = ssub.s32 2, 1
    %v97 = vld [vmem:[#allocation0] sm:%s96]
    %s99 = ssub.s32 2, 1
    %100 = vst [vmem:[%s1] sm:%s99] %v97

// kernel: classifier1_forward.1
$region0: #{classifier1_forward.1}
  #allocation0 [shape = 'u32[]', space=smem, size = 0x4, offset = 0x4, fixed_abs, tag = 'smem constant byte address 0x4 - core index']
  #allocation1 [shape = 'u32[72,128]{1,0:T(1,128)}', space=vmem, size = 0x9000, scoped, tag = 'internal scratch']
  %s0 = inlined_call_operand.vmem [shape: f32[128,128], index: 0, kind: input, shape index: {}]
  %s1 = inlined_call_operand.vmem [shape: bf16[128,192], index: 1, kind: input, shape index: {}]
  %s2 = inlined_call_operand.vmem [shape: f32[1,192], index: 2, kind: input, shape index: {}]
  %s3 = inlined_call_operand.vmem [shape: bf16[192,128], index: 3, kind: input, shape index: {}]
  %s4 = inlined_call_operand.vmem [shape: f32[1,128], index: 4, kind: input, shape index: {}]
  %s5 = inlined_call_operand.vmem [shape: bf16[128,16], index: 5, kind: input, shape index: {}]
  %s6 = inlined_call_operand.vmem [shape: f32[1,16], index: 6, kind: input, shape index: {}]
  %s7 = inlined_call_operand.vmem [shape: f32[128,16], index: 7, kind: output, shape index: {}]
  %s8 = sld [smem:[#allocation0]]
  $region38: #{classifier1_forward.1} parent=0
    _
  %s10 = ssub.s32 1, %s8
  %s11 = scalar_select 0, %s10, %s8
  // Predicated region
  $region2: #{classifier1_forward.1} parent=0 // pred_check
    _
  $region3: #{classifier1_forward.1} parent=0 // pred_check_branch
    %13 = sbr.rel (0) target = $region5
  $region4: #{classifier1_forward.1} parent=0 // pred_region
    _
  $region5: #{classifier1_forward.1} parent=0 // pred_fallthru
    _
  // Predicated region
  $region6: #{classifier1_forward.1} parent=0 // pred_check
    _
  $region7: #{classifier1_forward.1} parent=0 // pred_check_branch
    %15 = sbr.rel (0) target = $region9
  $region8: #{classifier1_forward.1} parent=0 // pred_region
    _
  $region9: #{classifier1_forward.1} parent=0 // pred_fallthru
    _
  // Predicated region
  $region10: #{classifier1_forward.1} parent=0 // pred_check
    _
  $region11: #{classifier1_forward.1} parent=0 // pred_check_branch
    %17 = sbr.rel (0) target = $region13
  $region12: #{classifier1_forward.1} parent=0 // pred_region
    _
  $region13: #{classifier1_forward.1} parent=0 // pred_fallthru
    _
  // Predicated region
  $region14: #{classifier1_forward.1} parent=0 // pred_check
    _
  $region15: #{classifier1_forward.1} parent=0 // pred_check_branch
    %19 = sbr.rel (0) target = $region17
  $region16: #{classifier1_forward.1} parent=0 // pred_region
    _
  $region17: #{classifier1_forward.1} parent=0 // pred_fallthru
    _
  // Predicated region
  $region18: #{classifier1_forward.1} parent=0 // pred_check
    _
  $region19: #{classifier1_forward.1} parent=0 // pred_check_branch
    %21 = sbr.rel (0) target = $region21
  $region20: #{classifier1_forward.1} parent=0 // pred_region
    _
  $region21: #{classifier1_forward.1} parent=0 // pred_fallthru
    _
  // Predicated region
  $region22: #{classifier1_forward.1} parent=0 // pred_check
    _
  $region23: #{classifier1_forward.1} parent=0 // pred_check_branch
    %23 = sbr.rel (0) target = $region25
  $region24: #{classifier1_forward.1} parent=0 // pred_region
    _
  $region25: #{classifier1_forward.1} parent=0 // pred_fallthru
    _
  // Predicated region
  $region26: #{classifier1_forward.1} parent=0 // pred_check
    _
  $region27: #{classifier1_forward.1} parent=0 // pred_check_branch
    %25 = sbr.rel (0) target = $region29
  $region28: #{classifier1_forward.1} parent=0 // pred_region
    _
  $region29: #{classifier1_forward.1} parent=0 // pred_fallthru
    _
  %v27 = vld [vmem:[%s0] sm:$0xff]
  %v28 = vld [vmem:[%s0 + $0x8] sm:$0xff]
  %v29 = vld [vmem:[%s0 + $0x10] sm:$0xff]
  %v30 = vld [vmem:[%s0 + $0x18] sm:$0xff]
  %v31 = vld [vmem:[%s0 + $0x20] sm:$0xff]
  %v32 = vld [vmem:[%s0 + $0x28] sm:$0xff]
  %v33 = vld [vmem:[%s0 + $0x30] sm:$0xff]
  %v34 = vld [vmem:[%s0 + $0x38] sm:$0xff]
  %v35 = vld [vmem:[%s0 + $0x40] sm:$0xff]
  %v36 = vld [vmem:[%s0 + $0x48] sm:$0xff]
  %v37 = vld [vmem:[%s0 + $0x50] sm:$0xff]
  %v38 = vld [vmem:[%s0 + $0x58] sm:$0xff]
  %v39 = vld [vmem:[%s0 + $0x60] sm:$0xff]
  %v40 = vld [vmem:[%s0 + $0x68] sm:$0xff]
  %v41 = vld [vmem:[%s0 + $0x70] sm:$0xff]
  %v42 = vld [vmem:[%s0 + $0x78] sm:$0xff]
  %v43 = vpack.c.bf16 %v28, %v27
  %v44 = vpack.c.bf16 %v30, %v29
  %v45 = vpack.c.bf16 %v32, %v31
  %v46 = vpack.c.bf16 %v34, %v33
  %v47 = vpack.c.bf16 %v36, %v35
  %v48 = vpack.c.bf16 %v38, %v37
  %v49 = vpack.c.bf16 %v40, %v39
  %v50 = vpack.c.bf16 %v42, %v41
  %v51 = vld [vmem:[%s1] sm:$0xff]
  %v52 = vld [vmem:[%s1 + $0x8] sm:$0xff]
  %v53 = vld [vmem:[%s1 + $0x10] sm:$0xff]
  %v54 = vld [vmem:[%s1 + $0x18] sm:$0xff]
  %v55 = vld [vmem:[%s1 + $0x20] sm:$0xff]
  %v56 = vld [vmem:[%s1 + $0x28] sm:$0xff]
  %v57 = vld [vmem:[%s1 + $0x30] sm:$0xff]
  %v58 = vld [vmem:[%s1 + $0x38] sm:$0xff]
  %v59 = vld [vmem:[%s1 + $0x40] sm:$0xff]
  %v60 = vld [vmem:[%s1 + $0x48] sm:$0xff]
  %v61 = vld [vmem:[%s1 + $0x50] sm:$0xff]
  %v62 = vld [vmem:[%s1 + $0x58] sm:$0xff]
  %v63 = vld [vmem:[%s1 + $0x60] sm:$0xff]
  %v64 = vld [vmem:[%s1 + $0x68] sm:$0xff]
  %v65 = vld [vmem:[%s1 + $0x70] sm:$0xff]
  %v66 = vld [vmem:[%s1 + $0x78] sm:$0xff]
  %v67 = vld [vmem:[%s2] sm:$0x3]
  %v69 = vperm.slane %v67, 0
  %v70 = vperm.slane %v67, 1
  %v89 = vunpack.c.l.b16 %v51
  %v90 = vunpack.c.h.b16 %v51
  %v91 = vunpack.c.l.b16 %v52
  %v92 = vunpack.c.h.b16 %v52
  %v93 = vunpack.c.l.b16 %v53
  %v94 = vunpack.c.h.b16 %v53
  %v95 = vunpack.c.l.b16 %v54
  %v96 = vunpack.c.h.b16 %v54
  %v97 = vunpack.c.l.b16 %v55
  %v98 = vunpack.c.h.b16 %v55
  %v99 = vunpack.c.l.b16 %v56
  %v100 = vunpack.c.h.b16 %v56
  %v101 = vunpack.c.l.b16 %v57
  %v102 = vunpack.c.h.b16 %v57
  %v103 = vunpack.c.l.b16 %v58
  %v104 = vunpack.c.h.b16 %v58
  %v105 = vunpack.c.l.b16 %v59
  %v106 = vunpack.c.h.b16 %v59
  %v107 = vunpack.c.l.b16 %v60
  %v108 = vunpack.c.h.b16 %v60
  %v109 = vunpack.c.l.b16 %v61
  %v110 = vunpack.c.h.b16 %v61
  %v111 = vunpack.c.l.b16 %v62
  %v112 = vunpack.c.h.b16 %v62
  %v113 = vunpack.c.l.b16 %v63
  %v114 = vunpack.c.h.b16 %v63
  %v115 = vunpack.c.l.b16 %v64
  %v116 = vunpack.c.h.b16 %v64
  %v117 = vunpack.c.l.b16 %v65
  %v118 = vunpack.c.h.b16 %v65
  %v119 = vunpack.c.l.b16 %v66
  %v120 = vunpack.c.h.b16 %v66
  %v121 = vpack.c.b16 %v91, %v89
  %v122 = vpack.c.b16 %v92, %v90
  %v123 = vpack.c.b16 %v95, %v93
  %v124 = vpack.c.b16 %v96, %v94
  %v125 = vpack.c.b16 %v99, %v97
  %v126 = vpack.c.b16 %v100, %v98
  %v127 = vpack.c.b16 %v103, %v101
  %v128 = vpack.c.b16 %v104, %v102
  %v129 = vpack.c.b16 %v107, %v105
  %v130 = vpack.c.b16 %v108, %v106
  %v131 = vpack.c.b16 %v111, %v109
  %v132 = vpack.c.b16 %v112, %v110
  %v133 = vpack.c.b16 %v115, %v113
  %v134 = vpack.c.b16 %v116, %v114
  %v135 = vpack.c.b16 %v119, %v117
  %v136 = vpack.c.b16 %v120, %v118
  %153 = vmatpush.bf16.msra.mxu0 %v135
  %154 = vmatpush.bf16.msra.mxu0 %v133
  %155 = vmatpush.bf16.msra.mxu0 %v131
  %156 = vmatpush.bf16.msra.mxu0 %v129
  %157 = vmatpush.bf16.msra.mxu0 %v127
  %158 = vmatpush.bf16.msra.mxu0 %v125
  %159 = vmatpush.bf16.msra.mxu0 %v123
  %160 = vmatpush.bf16.msra.mxu0 %v121
  %161 = vmatmul.bf16.gmra.mxu0 %v43
  %v162 = vpop.f32.mrf.mxu0
  %v163 = vadd.f32 %v69, %v162
  %v164 = vpop.f32.mrf.mxu0
  %v165 = vadd.f32 %v69, %v164
  %166 = vmatmul.bf16.gmra.mxu0 %v44
  %v167 = vpop.f32.mrf.mxu0
  %v168 = vadd.f32 %v69, %v167
  %v169 = vpop.f32.mrf.mxu0
  %v170 = vadd.f32 %v69, %v169
  %171 = vmatmul.bf16.gmra.mxu0 %v45
  %v172 = vpop.f32.mrf.mxu0
  %v173 = vadd.f32 %v69, %v172
  %v174 = vpop.f32.mrf.mxu0
  %v175 = vadd.f32 %v69, %v174
  %176 = vmatmul.bf16.gmra.mxu0 %v46
  %v177 = vpop.f32.mrf.mxu0
  %v178 = vadd.f32 %v69, %v177
  %v179 = vpop.f32.mrf.mxu0
  %v180 = vadd.f32 %v69, %v179
  %181 = vmatmul.bf16.gmra.mxu0 %v47
  %v182 = vpop.f32.mrf.mxu0
  %v183 = vadd.f32 %v69, %v182
  %v184 = vpop.f32.mrf.mxu0
  %v185 = vadd.f32 %v69, %v184
  %186 = vmatmul.bf16.gmra.mxu0 %v48
  %v187 = vpop.f32.mrf.mxu0
  %v188 = vadd.f32 %v69, %v187
  %v189 = vpop.f32.mrf.mxu0
  %v190 = vadd.f32 %v69, %v189
  %191 = vmatmul.bf16.gmra.mxu0 %v49
  %v192 = vpop.f32.mrf.mxu0
  %v193 = vadd.f32 %v69, %v192
  %v194 = vpop.f32.mrf.mxu0
  %v195 = vadd.f32 %v69, %v194
  %196 = vmatmul.bf16.gmra.mxu0 %v50
  %v197 = vpop.f32.mrf.mxu0
  %v198 = vadd.f32 %v69, %v197
  %v199 = vpop.f32.mrf.mxu0
  %v200 = vadd.f32 %v69, %v199
  %201 = vdwg.mxu0
  %202 = vmatpush.bf16.msra.mxu0 %v136
  %203 = vmatpush.bf16.msra.mxu0 %v134
  %204 = vmatpush.bf16.msra.mxu0 %v132
  %205 = vmatpush.bf16.msra.mxu0 %v130
  %206 = vmatpush.bf16.msra.mxu0 %v128
  %207 = vmatpush.bf16.msra.mxu0 %v126
  %208 = vmatpush.bf16.msra.mxu0 %v124
  %209 = vmatpush.bf16.msra.mxu0 %v122
  %210 = vmatmul.bf16.gmra.mxu0 %v43
  %v211 = vpop.f32.mrf.mxu0
  %v212 = vadd.f32 %v70, %v211
  %v213 = vpop.f32.mrf.mxu0
  %v214 = vadd.f32 %v70, %v213
  %215 = vmatmul.bf16.gmra.mxu0 %v44
  %v216 = vpop.f32.mrf.mxu0
  %v217 = vadd.f32 %v70, %v216
  %v218 = vpop.f32.mrf.mxu0
  %v219 = vadd.f32 %v70, %v218
  %220 = vmatmul.bf16.gmra.mxu0 %v45
  %v221 = vpop.f32.mrf.mxu0
  %v222 = vadd.f32 %v70, %v221
  %v223 = vpop.f32.mrf.mxu0
  %v224 = vadd.f32 %v70, %v223
  %225 = vmatmul.bf16.gmra.mxu0 %v46
  %v226 = vpop.f32.mrf.mxu0
  %v227 = vadd.f32 %v70, %v226
  %v228 = vpop.f32.mrf.mxu0
  %v229 = vadd.f32 %v70, %v228
  %230 = vmatmul.bf16.gmra.mxu0 %v47
  %v231 = vpop.f32.mrf.mxu0
  %v232 = vadd.f32 %v70, %v231
  %v233 = vpop.f32.mrf.mxu0
  %v234 = vadd.f32 %v70, %v233
  %235 = vmatmul.bf16.gmra.mxu0 %v48
  %v236 = vpop.f32.mrf.mxu0
  %v237 = vadd.f32 %v70, %v236
  %v238 = vpop.f32.mrf.mxu0
  %v239 = vadd.f32 %v70, %v238
  %240 = vmatmul.bf16.gmra.mxu0 %v49
  %v241 = vpop.f32.mrf.mxu0
  %v242 = vadd.f32 %v70, %v241
  %v243 = vpop.f32.mrf.mxu0
  %v244 = vadd.f32 %v70, %v243
  %245 = vmatmul.bf16.gmra.mxu0 %v50
  %v246 = vpop.f32.mrf.mxu0
  %v247 = vadd.f32 %v70, %v246
  %v248 = vpop.f32.mrf.mxu0
  %v249 = vadd.f32 %v70, %v248
  %250 = vdwg.mxu0
  %v251 = vmax.f32 %v163, 0.0
  %v252 = vmax.f32 %v212, 0.0
  %v253 = vmax.f32 %v165, 0.0
  %v254 = vmax.f32 %v214, 0.0
  %v255 = vmax.f32 %v168, 0.0
  %v256 = vmax.f32 %v217, 0.0
  %v257 = vmax.f32 %v170, 0.0
  %v258 = vmax.f32 %v219, 0.0
  %v259 = vmax.f32 %v173, 0.0
  %v260 = vmax.f32 %v222, 0.0
  %v261 = vmax.f32 %v175, 0.0
  %v262 = vmax.f32 %v224, 0.0
  %v263 = vmax.f32 %v178, 0.0
  %v264 = vmax.f32 %v227, 0.0
  %v265 = vmax.f32 %v180, 0.0
  %v266 = vmax.f32 %v229, 0.0
  %v267 = vmax.f32 %v183, 0.0
  %v268 = vmax.f32 %v232, 0.0
  %v269 = vmax.f32 %v185, 0.0
  %v270 = vmax.f32 %v234, 0.0
  %v271 = vmax.f32 %v188, 0.0
  %v272 = vmax.f32 %v237, 0.0
  %v273 = vmax.f32 %v190, 0.0
  %v274 = vmax.f32 %v239, 0.0
  %v275 = vmax.f32 %v193, 0.0
  %v276 = vmax.f32 %v242, 0.0
  %v277 = vmax.f32 %v195, 0.0
  %v278 = vmax.f32 %v244, 0.0
  %v279 = vmax.f32 %v198, 0.0
  %v280 = vmax.f32 %v247, 0.0
  %v281 = vmax.f32 %v200, 0.0
  %v282 = vmax.f32 %v249, 0.0
  %v283 = vpack.c.bf16 %v253, %v251
  %v284 = vpack.c.bf16 %v254, %v252
  %v285 = vpack.c.bf16 %v257, %v255
  %v286 = vpack.c.bf16 %v258, %v256
  %v287 = vpack.c.bf16 %v261, %v259
  %v288 = vpack.c.bf16 %v262, %v260
  %v289 = vpack.c.bf16 %v265, %v263
  %v290 = vpack.c.bf16 %v266, %v264
  %v291 = vpack.c.bf16 %v269, %v267
  %v292 = vpack.c.bf16 %v270, %v268
  %v293 = vpack.c.bf16 %v273, %v271
  %v294 = vpack.c.bf16 %v274, %v272
  %v295 = vpack.c.bf16 %v277, %v275
  %v296 = vpack.c.bf16 %v278, %v276
  %v297 = vpack.c.bf16 %v281, %v279
  %v298 = vpack.c.bf16 %v282, %v280
  %v299 = vld [vmem:[%s3] sm:$0xf]
  %v300 = vld [vmem:[%s3 + $0x4] sm:$0xf]
  %v301 = vld [vmem:[%s3 + $0x8] sm:$0xf]
  %v302 = vld [vmem:[%s3 + $0xc] sm:$0xf]
  %v303 = vld [vmem:[%s3 + $0x10] sm:$0xf]
  %v304 = vld [vmem:[%s3 + $0x14] sm:$0xf]
  %v305 = vld [vmem:[%s3 + $0x18] sm:$0xf]
  %v306 = vld [vmem:[%s3 + $0x1c] sm:$0xf]
  %v307 = vld [vmem:[%s3 + $0x20] sm:$0xf]
  %v308 = vld [vmem:[%s3 + $0x24] sm:$0xf]
  %v309 = vld [vmem:[%s3 + $0x28] sm:$0xf]
  %v310 = vld [vmem:[%s3 + $0x2c] sm:$0xf]
  %v311 = vld [vmem:[%s3 + $0x30] sm:$0xf]
  %v312 = vld [vmem:[%s3 + $0x34] sm:$0xf]
  %v313 = vld [vmem:[%s3 + $0x38] sm:$0xf]
  %v314 = vld [vmem:[%s3 + $0x3c] sm:$0xf]
  %v315 = vld [vmem:[%s3 + $0x40] sm:$0xf]
  %v316 = vld [vmem:[%s3 + $0x44] sm:$0xf]
  %v317 = vld [vmem:[%s3 + $0x48] sm:$0xf]
  %v318 = vld [vmem:[%s3 + $0x4c] sm:$0xf]
  %v319 = vld [vmem:[%s3 + $0x50] sm:$0xf]
  %v320 = vld [vmem:[%s3 + $0x54] sm:$0xf]
  %v321 = vld [vmem:[%s3 + $0x58] sm:$0xf]
  %v322 = vld [vmem:[%s3 + $0x5c] sm:$0xf]
  %v323 = vld [vmem:[%s4] sm:$0x1]
  %v325 = vperm.slane %v323, 0
  %v351 = vunpack.c.l.b16 %v299
  %v352 = vunpack.c.l.b16 %v300
  %v353 = vunpack.c.l.b16 %v301
  %v354 = vunpack.c.l.b16 %v302
  %v355 = vunpack.c.l.b16 %v303
  %v356 = vunpack.c.l.b16 %v304
  %v357 = vunpack.c.l.b16 %v305
  %v358 = vunpack.c.l.b16 %v306
  %v359 = vunpack.c.l.b16 %v307
  %v360 = vunpack.c.l.b16 %v308
  %v361 = vunpack.c.l.b16 %v309
  %v362 = vunpack.c.l.b16 %v310
  %v363 = vunpack.c.l.b16 %v311
  %v364 = vunpack.c.l.b16 %v312
  %v365 = vunpack.c.l.b16 %v313
  %v366 = vunpack.c.l.b16 %v314
  %v367 = vunpack.c.l.b16 %v315
  %v368 = vunpack.c.l.b16 %v316
  %v369 = vunpack.c.l.b16 %v317
  %v370 = vunpack.c.l.b16 %v318
  %v371 = vunpack.c.l.b16 %v319
  %v372 = vunpack.c.l.b16 %v320
  %v373 = vunpack.c.l.b16 %v321
  %v374 = vunpack.c.l.b16 %v322
  %v375 = vpack.c.b16 %v352, %v351
  %v376 = vpack.c.b16 %v354, %v353
  %v377 = vpack.c.b16 %v356, %v355
  %v378 = vpack.c.b16 %v358, %v357
  %v379 = vpack.c.b16 %v360, %v359
  %v380 = vpack.c.b16 %v362, %v361
  %v381 = vpack.c.b16 %v364, %v363
  %v382 = vpack.c.b16 %v366, %v365
  %v383 = vpack.c.b16 %v368, %v367
  %v384 = vpack.c.b16 %v370, %v369
  %v385 = vpack.c.b16 %v372, %v371
  %v386 = vpack.c.b16 %v374, %v373
  %vm399 = vcmask 523264
  %v401 = vsel %vm399, %v284, 0
  %v404 = vsel %vm399, %v286, 0
  %v407 = vsel %vm399, %v288, 0
  %v410 = vsel %vm399, %v290, 0
  %v413 = vsel %vm399, %v292, 0
  %v416 = vsel %vm399, %v294, 0
  %v419 = vsel %vm399, %v296, 0
  %v422 = vsel %vm399, %v298, 0
  %424 = vmatpush.bf16.msra.mxu0 %v382
  %425 = vmatpush.bf16.msra.mxu0 %v381
  %426 = vmatpush.bf16.msra.mxu0 %v380
  %427 = vmatpush.bf16.msra.mxu0 %v379
  %428 = vmatpush.bf16.msra.mxu0 %v378
  %429 = vmatpush.bf16.msra.mxu0 %v377
  %430 = vmatpush.bf16.msra.mxu0 %v376
  %431 = vmatpush.bf16.msra.mxu0 %v375
  %432 = vmatmul.bf16.gmra.mxu0 %v283
  %v433 = vpop.f32.mrf.mxu0
  %v434 = vadd.f32 %v325, %v433
  %v435 = vpop.f32.mrf.mxu0
  %v436 = vadd.f32 %v325, %v435
  %437 = vmatmul.bf16.gmra.mxu0 %v285
  %v438 = vpop.f32.mrf.mxu0
  %v439 = vadd.f32 %v325, %v438
  %v440 = vpop.f32.mrf.mxu0
  %v441 = vadd.f32 %v325, %v440
  %442 = vmatmul.bf16.gmra.mxu0 %v287
  %v443 = vpop.f32.mrf.mxu0
  %v444 = vadd.f32 %v325, %v443
  %v445 = vpop.f32.mrf.mxu0
  %v446 = vadd.f32 %v325, %v445
  %447 = vmatmul.bf16.gmra.mxu0 %v289
  %v448 = vpop.f32.mrf.mxu0
  %v449 = vadd.f32 %v325, %v448
  %v450 = vpop.f32.mrf.mxu0
  %v451 = vadd.f32 %v325, %v450
  %452 = vmatmul.bf16.gmra.mxu0 %v291
  %v453 = vpop.f32.mrf.mxu0
  %v454 = vadd.f32 %v325, %v453
  %v455 = vpop.f32.mrf.mxu0
  %v456 = vadd.f32 %v325, %v455
  %457 = vmatmul.bf16.gmra.mxu0 %v293
  %v458 = vpop.f32.mrf.mxu0
  %v459 = vadd.f32 %v325, %v458
  %v460 = vpop.f32.mrf.mxu0
  %v461 = vadd.f32 %v325, %v460
  %462 = vmatmul.bf16.gmra.mxu0 %v295
  %v463 = vpop.f32.mrf.mxu0
  %v464 = vadd.f32 %v325, %v463
  %v465 = vpop.f32.mrf.mxu0
  %v466 = vadd.f32 %v325, %v465
  %467 = vmatmul.bf16.gmra.mxu0 %v297
  %v468 = vpop.f32.mrf.mxu0
  %v469 = vadd.f32 %v325, %v468
  %v470 = vpop.f32.mrf.mxu0
  %v471 = vadd.f32 %v325, %v470
  %472 = vdwg.mxu0
  %473 = vmatpush.bf16.msra.mxu0 0
  %474 = vmatpush.bf16.msra.mxu0 0
  %475 = vmatpush.bf16.msra.mxu0 0
  %476 = vmatpush.bf16.msra.mxu0 0
  %477 = vmatpush.bf16.msra.mxu0 %v386
  %478 = vmatpush.bf16.msra.mxu0 %v385
  %479 = vmatpush.bf16.msra.mxu0 %v384
  %480 = vmatpush.bf16.msra.mxu0 %v383
  %481 = vmatmul.bf16.gmra.mxu0 %v401
  %v482 = vpop.f32.mrf.mxu0
  %v483 = vadd.f32 %v434, %v482
  %v484 = vpop.f32.mrf.mxu0
  %v485 = vadd.f32 %v436, %v484
  %486 = vmatmul.bf16.gmra.mxu0 %v404
  %v487 = vpop.f32.mrf.mxu0
  %v488 = vadd.f32 %v439, %v487
  %v489 = vpop.f32.mrf.mxu0
  %v490 = vadd.f32 %v441, %v489
  %491 = vmatmul.bf16.gmra.mxu0 %v407
  %v492 = vpop.f32.mrf.mxu0
  %v493 = vadd.f32 %v444, %v492
  %v494 = vpop.f32.mrf.mxu0
  %v495 = vadd.f32 %v446, %v494
  %496 = vmatmul.bf16.gmra.mxu0 %v410
  %v497 = vpop.f32.mrf.mxu0
  %v498 = vadd.f32 %v449, %v497
  %v499 = vpop.f32.mrf.mxu0
  %v500 = vadd.f32 %v451, %v499
  %501 = vmatmul.bf16.gmra.mxu0 %v413
  %v502 = vpop.f32.mrf.mxu0
  %v503 = vadd.f32 %v454, %v502
  %v504 = vpop.f32.mrf.mxu0
  %v505 = vadd.f32 %v456, %v504
  %506 = vmatmul.bf16.gmra.mxu0 %v416
  %v507 = vpop.f32.mrf.mxu0
  %v508 = vadd.f32 %v459, %v507
  %v509 = vpop.f32.mrf.mxu0
  %v510 = vadd.f32 %v461, %v509
  %511 = vmatmul.bf16.gmra.mxu0 %v419
  %v512 = vpop.f32.mrf.mxu0
  %v513 = vadd.f32 %v464, %v512
  %v514 = vpop.f32.mrf.mxu0
  %v515 = vadd.f32 %v466, %v514
  %516 = vmatmul.bf16.gmra.mxu0 %v422
  %v517 = vpop.f32.mrf.mxu0
  %v518 = vadd.f32 %v469, %v517
  %v519 = vpop.f32.mrf.mxu0
  %v520 = vadd.f32 %v471, %v519
  %521 = vdwg.mxu0
  %v522 = vmax.f32 %v483, 0.0
  %v523 = vmax.f32 %v485, 0.0
  %v524 = vmax.f32 %v488, 0.0
  %v525 = vmax.f32 %v490, 0.0
  %v526 = vmax.f32 %v493, 0.0
  %v527 = vmax.f32 %v495, 0.0
  %v528 = vmax.f32 %v498, 0.0
  %v529 = vmax.f32 %v500, 0.0
  %v530 = vmax.f32 %v503, 0.0
  %v531 = vmax.f32 %v505, 0.0
  %v532 = vmax.f32 %v508, 0.0
  %v533 = vmax.f32 %v510, 0.0
  %v534 = vmax.f32 %v513, 0.0
  %v535 = vmax.f32 %v515, 0.0
  %v536 = vmax.f32 %v518, 0.0
  %v537 = vmax.f32 %v520, 0.0
  %v538 = vpack.c.bf16 %v523, %v522
  %v539 = vpack.c.bf16 %v525, %v524
  %v540 = vpack.c.bf16 %v527, %v526
  %v541 = vpack.c.bf16 %v529, %v528
  %v542 = vpack.c.bf16 %v531, %v530
  %v543 = vpack.c.bf16 %v533, %v532
  %v544 = vpack.c.bf16 %v535, %v534
  %v545 = vpack.c.bf16 %v537, %v536
  %v546 = vld [vmem:[%s5] sm:$0xf]
  %v547 = vld [vmem:[%s5 + $0x4] sm:$0xf]
  %v548 = vld [vmem:[%s5 + $0x8] sm:$0xf]
  %v549 = vld [vmem:[%s5 + $0xc] sm:$0xf]
  %v550 = vld [vmem:[%s5 + $0x10] sm:$0xf]
  %v551 = vld [vmem:[%s5 + $0x14] sm:$0xf]
  %v552 = vld [vmem:[%s5 + $0x18] sm:$0xf]
  %v553 = vld [vmem:[%s5 + $0x1c] sm:$0xf]
  %v554 = vld [vmem:[%s5 + $0x20] sm:$0xf]
  %v555 = vld [vmem:[%s5 + $0x24] sm:$0xf]
  %v556 = vld [vmem:[%s5 + $0x28] sm:$0xf]
  %v557 = vld [vmem:[%s5 + $0x2c] sm:$0xf]
  %v558 = vld [vmem:[%s5 + $0x30] sm:$0xf]
  %v559 = vld [vmem:[%s5 + $0x34] sm:$0xf]
  %v560 = vld [vmem:[%s5 + $0x38] sm:$0xf]
  %v561 = vld [vmem:[%s5 + $0x3c] sm:$0xf]
  %v562 = vld [vmem:[%s6] sm:$0x1]
  %v564 = vperm.slane %v562, 0
  %v582 = vunpack.c.l.b16 %v546
  %v583 = vunpack.c.l.b16 %v547
  %v584 = vunpack.c.l.b16 %v548
  %v585 = vunpack.c.l.b16 %v549
  %v586 = vunpack.c.l.b16 %v550
  %v587 = vunpack.c.l.b16 %v551
  %v588 = vunpack.c.l.b16 %v552
  %v589 = vunpack.c.l.b16 %v553
  %v590 = vunpack.c.l.b16 %v554
  %v591 = vunpack.c.l.b16 %v555
  %v592 = vunpack.c.l.b16 %v556
  %v593 = vunpack.c.l.b16 %v557
  %v594 = vunpack.c.l.b16 %v558
  %v595 = vunpack.c.l.b16 %v559
  %v596 = vunpack.c.l.b16 %v560
  %v597 = vunpack.c.l.b16 %v561
  %v598 = vpack.c.b16 %v583, %v582
  %v599 = vpack.c.b16 %v585, %v584
  %v600 = vpack.c.b16 %v587, %v586
  %v601 = vpack.c.b16 %v589, %v588
  %v602 = vpack.c.b16 %v591, %v590
  %v603 = vpack.c.b16 %v593, %v592
  %v604 = vpack.c.b16 %v595, %v594
  %v605 = vpack.c.b16 %v597, %v596
  %614 = vmatpush.bf16.msra.mxu0 %v605
  %615 = vmatpush.bf16.msra.mxu0 %v604
  %616 = vmatpush.bf16.msra.mxu0 %v603
  %617 = vmatpush.bf16.msra.mxu0 %v602
  %618 = vmatpush.bf16.msra.mxu0 %v601
  %619 = vmatpush.bf16.msra.mxu0 %v600
  %620 = vmatpush.bf16.msra.mxu0 %v599
  %621 = vmatpush.bf16.msra.mxu0 %v598
  %622 = vmatmul.bf16.gmra.mxu0 %v538
  %v623 = vpop.f32.mrf.mxu0
  %v624 = vadd.f32 %v564, %v623
  %v625 = vpop.f32.mrf.mxu0
  %v626 = vadd.f32 %v564, %v625
  %627 = vmatmul.bf16.gmra.mxu0 %v539
  %v628 = vpop.f32.mrf.mxu0
  %v629 = vadd.f32 %v564, %v628
  %v630 = vpop.f32.mrf.mxu0
  %v631 = vadd.f32 %v564, %v630
  %632 = vmatmul.bf16.gmra.mxu0 %v540
  %v633 = vpop.f32.mrf.mxu0
  %v634 = vadd.f32 %v564, %v633
  %v635 = vpop.f32.mrf.mxu0
  %v636 = vadd.f32 %v564, %v635
  %637 = vmatmul.bf16.gmra.mxu0 %v541
  %v638 = vpop.f32.mrf.mxu0
  %v639 = vadd.f32 %v564, %v638
  %v640 = vpop.f32.mrf.mxu0
  %v641 = vadd.f32 %v564, %v640
  %642 = vmatmul.bf16.gmra.mxu0 %v542
  %v643 = vpop.f32.mrf.mxu0
  %v644 = vadd.f32 %v564, %v643
  %v645 = vpop.f32.mrf.mxu0
  %v646 = vadd.f32 %v564, %v645
  %647 = vmatmul.bf16.gmra.mxu0 %v543
  %v648 = vpop.f32.mrf.mxu0
  %v649 = vadd.f32 %v564, %v648
  %v650 = vpop.f32.mrf.mxu0
  %v651 = vadd.f32 %v564, %v650
  %652 = vmatmul.bf16.gmra.mxu0 %v544
  %v653 = vpop.f32.mrf.mxu0
  %v654 = vadd.f32 %v564, %v653
  %v655 = vpop.f32.mrf.mxu0
  %v656 = vadd.f32 %v564, %v655
  %657 = vmatmul.bf16.gmra.mxu0 %v545
  %v658 = vpop.f32.mrf.mxu0
  %v659 = vadd.f32 %v564, %v658
  %v660 = vpop.f32.mrf.mxu0
  %v661 = vadd.f32 %v564, %v660
  %662 = vdwg.mxu0
  %v663 = vxor.u32 %v624, 2147483648
  %v664 = vxor.u32 %v626, 2147483648
  %v665 = vxor.u32 %v629, 2147483648
  %v666 = vxor.u32 %v631, 2147483648
  %v667 = vxor.u32 %v634, 2147483648
  %v668 = vxor.u32 %v636, 2147483648
  %v669 = vxor.u32 %v639, 2147483648
  %v670 = vxor.u32 %v641, 2147483648
  %v671 = vxor.u32 %v644, 2147483648
  %v672 = vxor.u32 %v646, 2147483648
  %v673 = vxor.u32 %v649, 2147483648
  %v674 = vxor.u32 %v651, 2147483648
  %v675 = vxor.u32 %v654, 2147483648
  %v676 = vxor.u32 %v656, 2147483648
  %v677 = vxor.u32 %v659, 2147483648
  %v678 = vxor.u32 %v661, 2147483648
  %v679 = vmul.f32 %v663, 1.442695
  %v680 = vpow.pop %v679
  %v681 = vmul.f32 %v664, 1.442695
  %v682 = vpow.pop %v681
  %v683 = vmul.f32 %v665, 1.442695
  %v684 = vpow.pop %v683
  %v685 = vmul.f32 %v666, 1.442695
  %v686 = vpow.pop %v685
  %v687 = vmul.f32 %v667, 1.442695
  %v688 = vpow.pop %v687
  %v689 = vmul.f32 %v668, 1.442695
  %v690 = vpow.pop %v689
  %v691 = vmul.f32 %v669, 1.442695
  %v692 = vpow.pop %v691
  %v693 = vmul.f32 %v670, 1.442695
  %v694 = vpow.pop %v693
  %v695 = vmul.f32 %v671, 1.442695
  %v696 = vpow.pop %v695
  %v697 = vmul.f32 %v672, 1.442695
  %v698 = vpow.pop %v697
  %v699 = vmul.f32 %v673, 1.442695
  %v700 = vpow.pop %v699
  %v701 = vmul.f32 %v674, 1.442695
  %v702 = vpow.pop %v701
  %v703 = vmul.f32 %v675, 1.442695
  %v704 = vpow.pop %v703
  %v705 = vmul.f32 %v676, 1.442695
  %v706 = vpow.pop %v705
  %v707 = vmul.f32 %v677, 1.442695
  %v708 = vpow.pop %v707
  %v709 = vmul.f32 %v678, 1.442695
  %v710 = vpow.pop %v709
  %v711 = vadd.f32 %v680, 1.0
  %v712 = vadd.f32 %v682, 1.0
  %v713 = vadd.f32 %v684, 1.0
  %v714 = vadd.f32 %v686, 1.0
  %v715 = vadd.f32 %v688, 1.0
  %v716 = vadd.f32 %v690, 1.0
  %v717 = vadd.f32 %v692, 1.0
  %v718 = vadd.f32 %v694, 1.0
  %v719 = vadd.f32 %v696, 1.0
  %v720 = vadd.f32 %v698, 1.0
  %v721 = vadd.f32 %v700, 1.0
  %v722 = vadd.f32 %v702, 1.0
  %v723 = vadd.f32 %v704, 1.0
  %v724 = vadd.f32 %v706, 1.0
  %v725 = vadd.f32 %v708, 1.0
  %v726 = vadd.f32 %v710, 1.0
  %v727 = vrcp.pop %v711
  %v728 = vmul.f32 %v711, %v727
  %v729 = vsub.f32 1.0, %v728
  %v730 = vmul.f32 %v727, %v729
  %v731 = vadd.f32 %v727, %v730
  %vm732 = vweird.f32 %v711
  %vm733 = vweird.f32 %v727
  %vm734 = vmor %vm732, %vm733
  %v735 = vsel %vm734, %v727, %v731
  %v736 = vand.u32 2147483647, %v711
  %vm737 = vcmp.eq.f32.partialorder %v736, 8.507059e+37
  %v738 = vand.u32 %v711, 2147483648
  %v739 = vor.u32 1.1754944e-38, %v738
  %v740 = vsel %vm737, %v739, %v735
  %v741 = vmul.f32 1.0, %v740
  %v742 = vrcp.pop %v712
  %v743 = vmul.f32 %v712, %v742
  %v744 = vsub.f32 1.0, %v743
  %v745 = vmul.f32 %v742, %v744
  %v746 = vadd.f32 %v742, %v745
  %vm747 = vweird.f32 %v712
  %vm748 = vweird.f32 %v742
  %vm749 = vmor %vm747, %vm748
  %v750 = vsel %vm749, %v742, %v746
  %v751 = vand.u32 2147483647, %v712
  %vm752 = vcmp.eq.f32.partialorder %v751, 8.507059e+37
  %v753 = vand.u32 %v712, 2147483648
  %v754 = vor.u32 1.1754944e-38, %v753
  %v755 = vsel %vm752, %v754, %v750
  %v756 = vmul.f32 1.0, %v755
  %v757 = vrcp.pop %v713
  %v758 = vmul.f32 %v713, %v757
  %v759 = vsub.f32 1.0, %v758
  %v760 = vmul.f32 %v757, %v759
  %v761 = vadd.f32 %v757, %v760
  %vm762 = vweird.f32 %v713
  %vm763 = vweird.f32 %v757
  %vm764 = vmor %vm762, %vm763
  %v765 = vsel %vm764, %v757, %v761
  %v766 = vand.u32 2147483647, %v713
  %vm767 = vcmp.eq.f32.partialorder %v766, 8.507059e+37
  %v768 = vand.u32 %v713, 2147483648
  %v769 = vor.u32 1.1754944e-38, %v768
  %v770 = vsel %vm767, %v769, %v765
  %v771 = vmul.f32 1.0, %v770
  %v772 = vrcp.pop %v714
  %v773 = vmul.f32 %v714, %v772
  %v774 = vsub.f32 1.0, %v773
  %v775 = vmul.f32 %v772, %v774
  %v776 = vadd.f32 %v772, %v775
  %vm777 = vweird.f32 %v714
  %vm778 = vweird.f32 %v772
  %vm779 = vmor %vm777, %vm778
  %v780 = vsel %vm779, %v772, %v776
  %v781 = vand.u32 2147483647, %v714
  %vm782 = vcmp.eq.f32.partialorder %v781, 8.507059e+37
  %v783 = vand.u32 %v714, 2147483648
  %v784 = vor.u32 1.1754944e-38, %v783
  %v785 = vsel %vm782, %v784, %v780
  %v786 = vmul.f32 1.0, %v785
  %v787 = vrcp.pop %v715
  %v788 = vmul.f32 %v715, %v787
  %v789 = vsub.f32 1.0, %v788
  %v790 = vmul.f32 %v787, %v789
  %v791 = vadd.f32 %v787, %v790
  %vm792 = vweird.f32 %v715
  %vm793 = vweird.f32 %v787
  %vm794 = vmor %vm792, %vm793
  %v795 = vsel %vm794, %v787, %v791
  %v796 = vand.u32 2147483647, %v715
  %vm797 = vcmp.eq.f32.partialorder %v796, 8.507059e+37
  %v798 = vand.u32 %v715, 2147483648
  %v799 = vor.u32 1.1754944e-38, %v798
  %v800 = vsel %vm797, %v799, %v795
  %v801 = vmul.f32 1.0, %v800
  %v802 = vrcp.pop %v716
  %v803 = vmul.f32 %v716, %v802
  %v804 = vsub.f32 1.0, %v803
  %v805 = vmul.f32 %v802, %v804
  %v806 = vadd.f32 %v802, %v805
  %vm807 = vweird.f32 %v716
  %vm808 = vweird.f32 %v802
  %vm809 = vmor %vm807, %vm808
  %v810 = vsel %vm809, %v802, %v806
  %v811 = vand.u32 2147483647, %v716
  %vm812 = vcmp.eq.f32.partialorder %v811, 8.507059e+37
  %v813 = vand.u32 %v716, 2147483648
  %v814 = vor.u32 1.1754944e-38, %v813
  %v815 = vsel %vm812, %v814, %v810
  %v816 = vmul.f32 1.0, %v815
  %v817 = vrcp.pop %v717
  %v818 = vmul.f32 %v717, %v817
  %v819 = vsub.f32 1.0, %v818
  %v820 = vmul.f32 %v817, %v819
  %v821 = vadd.f32 %v817, %v820
  %vm822 = vweird.f32 %v717
  %vm823 = vweird.f32 %v817
  %vm824 = vmor %vm822, %vm823
  %v825 = vsel %vm824, %v817, %v821
  %v826 = vand.u32 2147483647, %v717
  %vm827 = vcmp.eq.f32.partialorder %v826, 8.507059e+37
  %v828 = vand.u32 %v717, 2147483648
  %v829 = vor.u32 1.1754944e-38, %v828
  %v830 = vsel %vm827, %v829, %v825
  %v831 = vmul.f32 1.0, %v830
  %v832 = vrcp.pop %v718
  %v833 = vmul.f32 %v718, %v832
  %v834 = vsub.f32 1.0, %v833
  %v835 = vmul.f32 %v832, %v834
  %v836 = vadd.f32 %v832, %v835
  %vm837 = vweird.f32 %v718
  %vm838 = vweird.f32 %v832
  %vm839 = vmor %vm837, %vm838
  %v840 = vsel %vm839, %v832, %v836
  %v841 = vand.u32 2147483647, %v718
  %vm842 = vcmp.eq.f32.partialorder %v841, 8.507059e+37
  %v843 = vand.u32 %v718, 2147483648
  %v844 = vor.u32 1.1754944e-38, %v843
  %v845 = vsel %vm842, %v844, %v840
  %v846 = vmul.f32 1.0, %v845
  %v847 = vrcp.pop %v719
  %v848 = vmul.f32 %v719, %v847
  %v849 = vsub.f32 1.0, %v848
  %v850 = vmul.f32 %v847, %v849
  %v851 = vadd.f32 %v847, %v850
  %vm852 = vweird.f32 %v719
  %vm853 = vweird.f32 %v847
  %vm854 = vmor %vm852, %vm853
  %v855 = vsel %vm854, %v847, %v851
  %v856 = vand.u32 2147483647, %v719
  %vm857 = vcmp.eq.f32.partialorder %v856, 8.507059e+37
  %v858 = vand.u32 %v719, 2147483648
  %v859 = vor.u32 1.1754944e-38, %v858
  %v860 = vsel %vm857, %v859, %v855
  %v861 = vmul.f32 1.0, %v860
  %v862 = vrcp.pop %v720
  %v863 = vmul.f32 %v720, %v862
  %v864 = vsub.f32 1.0, %v863
  %v865 = vmul.f32 %v862, %v864
  %v866 = vadd.f32 %v862, %v865
  %vm867 = vweird.f32 %v720
  %vm868 = vweird.f32 %v862
  %vm869 = vmor %vm867, %vm868
  %v870 = vsel %vm869, %v862, %v866
  %v871 = vand.u32 2147483647, %v720
  %vm872 = vcmp.eq.f32.partialorder %v871, 8.507059e+37
  %v873 = vand.u32 %v720, 2147483648
  %v874 = vor.u32 1.1754944e-38, %v873
  %v875 = vsel %vm872, %v874, %v870
  %v876 = vmul.f32 1.0, %v875
  %v877 = vrcp.pop %v721
  %v878 = vmul.f32 %v721, %v877
  %v879 = vsub.f32 1.0, %v878
  %v880 = vmul.f32 %v877, %v879
  %v881 = vadd.f32 %v877, %v880
  %vm882 = vweird.f32 %v721
  %vm883 = vweird.f32 %v877
  %vm884 = vmor %vm882, %vm883
  %v885 = vsel %vm884, %v877, %v881
  %v886 = vand.u32 2147483647, %v721
  %vm887 = vcmp.eq.f32.partialorder %v886, 8.507059e+37
  %v888 = vand.u32 %v721, 2147483648
  %v889 = vor.u32 1.1754944e-38, %v888
  %v890 = vsel %vm887, %v889, %v885
  %v891 = vmul.f32 1.0, %v890
  %v892 = vrcp.pop %v722
  %v893 = vmul.f32 %v722, %v892
  %v894 = vsub.f32 1.0, %v893
  %v895 = vmul.f32 %v892, %v894
  %v896 = vadd.f32 %v892, %v895
  %vm897 = vweird.f32 %v722
  %vm898 = vweird.f32 %v892
  %vm899 = vmor %vm897, %vm898
  %v900 = vsel %vm899, %v892, %v896
  %v901 = vand.u32 2147483647, %v722
  %vm902 = vcmp.eq.f32.partialorder %v901, 8.507059e+37
  %v903 = vand.u32 %v722, 2147483648
  %v904 = vor.u32 1.1754944e-38, %v903
  %v905 = vsel %vm902, %v904, %v900
  %v906 = vmul.f32 1.0, %v905
  %v907 = vrcp.pop %v723
  %v908 = vmul.f32 %v723, %v907
  %v909 = vsub.f32 1.0, %v908
  %v910 = vmul.f32 %v907, %v909
  %v911 = vadd.f32 %v907, %v910
  %vm912 = vweird.f32 %v723
  %vm913 = vweird.f32 %v907
  %vm914 = vmor %vm912, %vm913
  %v915 = vsel %vm914, %v907, %v911
  %v916 = vand.u32 2147483647, %v723
  %vm917 = vcmp.eq.f32.partialorder %v916, 8.507059e+37
  %v918 = vand.u32 %v723, 2147483648
  %v919 = vor.u32 1.1754944e-38, %v918
  %v920 = vsel %vm917, %v919, %v915
  %v921 = vmul.f32 1.0, %v920
  %v922 = vrcp.pop %v724
  %v923 = vmul.f32 %v724, %v922
  %v924 = vsub.f32 1.0, %v923
  %v925 = vmul.f32 %v922, %v924
  %v926 = vadd.f32 %v922, %v925
  %vm927 = vweird.f32 %v724
  %vm928 = vweird.f32 %v922
  %vm929 = vmor %vm927, %vm928
  %v930 = vsel %vm929, %v922, %v926
  %v931 = vand.u32 2147483647, %v724
  %vm932 = vcmp.eq.f32.partialorder %v931, 8.507059e+37
  %v933 = vand.u32 %v724, 2147483648
  %v934 = vor.u32 1.1754944e-38, %v933
  %v935 = vsel %vm932, %v934, %v930
  %v936 = vmul.f32 1.0, %v935
  %v937 = vrcp.pop %v725
  %v938 = vmul.f32 %v725, %v937
  %v939 = vsub.f32 1.0, %v938
  %v940 = vmul.f32 %v937, %v939
  %v941 = vadd.f32 %v937, %v940
  %vm942 = vweird.f32 %v725
  %vm943 = vweird.f32 %v937
  %vm944 = vmor %vm942, %vm943
  %v945 = vsel %vm944, %v937, %v941
  %v946 = vand.u32 2147483647, %v725
  %vm947 = vcmp.eq.f32.partialorder %v946, 8.507059e+37
  %v948 = vand.u32 %v725, 2147483648
  %v949 = vor.u32 1.1754944e-38, %v948
  %v950 = vsel %vm947, %v949, %v945
  %v951 = vmul.f32 1.0, %v950
  %v952 = vrcp.pop %v726
  %v953 = vmul.f32 %v726, %v952
  %v954 = vsub.f32 1.0, %v953
  %v955 = vmul.f32 %v952, %v954
  %v956 = vadd.f32 %v952, %v955
  %vm957 = vweird.f32 %v726
  %vm958 = vweird.f32 %v952
  %vm959 = vmor %vm957, %vm958
  %v960 = vsel %vm959, %v952, %v956
  %v961 = vand.u32 2147483647, %v726
  %vm962 = vcmp.eq.f32.partialorder %v961, 8.507059e+37
  %v963 = vand.u32 %v726, 2147483648
  %v964 = vor.u32 1.1754944e-38, %v963
  %v965 = vsel %vm962, %v964, %v960
  %v966 = vmul.f32 1.0, %v965
  %vm967 = vcmask 130048
  %968 = vst.msk [vmem:[%s7] sm:$0xff] %vm967, %v741
  %969 = vst.msk [vmem:[%s7 + $0x8] sm:$0xff] %vm967, %v756
  %970 = vst.msk [vmem:[%s7 + $0x10] sm:$0xff] %vm967, %v771
  %971 = vst.msk [vmem:[%s7 + $0x18] sm:$0xff] %vm967, %v786
  %972 = vst.msk [vmem:[%s7 + $0x20] sm:$0xff] %vm967, %v801
  %973 = vst.msk [vmem:[%s7 + $0x28] sm:$0xff] %vm967, %v816
  %974 = vst.msk [vmem:[%s7 + $0x30] sm:$0xff] %vm967, %v831
  %975 = vst.msk [vmem:[%s7 + $0x38] sm:$0xff] %vm967, %v846
  %976 = vst.msk [vmem:[%s7 + $0x40] sm:$0xff] %vm967, %v861
  %977 = vst.msk [vmem:[%s7 + $0x48] sm:$0xff] %vm967, %v876
  %978 = vst.msk [vmem:[%s7 + $0x50] sm:$0xff] %vm967, %v891
  %979 = vst.msk [vmem:[%s7 + $0x58] sm:$0xff] %vm967, %v906
  %980 = vst.msk [vmem:[%s7 + $0x60] sm:$0xff] %vm967, %v921
  %981 = vst.msk [vmem:[%s7 + $0x68] sm:$0xff] %vm967, %v936
  %982 = vst.msk [vmem:[%s7 + $0x70] sm:$0xff] %vm967, %v951
  %983 = vst.msk [vmem:[%s7 + $0x78] sm:$0xff] %vm967, %v966
  // Predicated region
  $region30: #{classifier1_forward.1} parent=0 // pred_check
    _
  $region31: #{classifier1_forward.1} parent=0 // pred_check_branch
    %985 = sbr.rel (0) target = $region33
  $region32: #{classifier1_forward.1} parent=0 // pred_region
    _
  $region33: #{classifier1_forward.1} parent=0 // pred_fallthru
    _
  // Predicated region
  $region34: #{classifier1_forward.1} parent=0 // pred_check
    _
  $region35: #{classifier1_forward.1} parent=0 // pred_check_branch
    %987 = sbr.rel (0) target = $region37
  $region36: #{classifier1_forward.1} parent=0 // pred_region
    _
  $region37: #{classifier1_forward.1} parent=0 // pred_fallthru
    _

</llo_original>
